<compile_context>
chip_gen: v7x
topology: tpu7x:2x2x1
jax: 0.10.0
libtpu: 0.0.40
codegen_flags: <defaults>
</compile_context>

<pallas_src>
import jax
import jax.numpy as jnp
from jax.experimental import pallas as pl
from jax.experimental.pallas import tpu as pltpu


_NEG_BIG = -1e30  # bias on padded class columns; exp() underflows to exactly 0


def _round_up(x, m):
    return ((x + m - 1) // m) * m


def _cdiv(a, b):
    return -(-a // b)


def _clf_kernel(x_ref, w1_ref, b1_ref, w2_ref, b2_ref, out_ref):
    # x_ref: (TB, H) f32 -- the [CLS] embedding of each sequence in the tile.
    x = x_ref[...].astype(jnp.bfloat16)              # cast hides under MXU time

    # classifier.dense + tanh  (bf16 x bf16 -> f32 accumulate on the MXU)
    h = jnp.dot(x, w1_ref[...], preferred_element_type=jnp.float32)
    h = jnp.tanh(h + b1_ref[...])                    # (TB, H) f32

    # classifier.out_proj -> logits (class dim padded to a lane multiple)
    logits = jnp.dot(h.astype(jnp.bfloat16), w2_ref[...],
                     preferred_element_type=jnp.float32)
    logits = logits + b2_ref[...]                    # (TB, C_pad) f32

    # Softmax over classes; padded columns carry a -1e30 bias -> exp() == 0,
    # so they contribute nothing to the denominator. Exact divide (not approx
    # reciprocal): attribution downstreams are value-sensitive.
    m = jnp.max(logits, axis=1, keepdims=True)
    e = jnp.exp(logits - m)
    denom = jnp.sum(e, axis=1, keepdims=True)

    # Lane-dense store of the whole padded prob block (unmasked vst); the
    # target column is selected in the wrapper.
    out_ref[...] = (e / denom).astype(out_ref.dtype)


def clf_wrapper_forward(inputs_embeds, w1, b1, w2, b2,
                        target_label=1, block_b=512):
    """Pallas equivalent of CLFWrapper.forward(inputs_embeds, target_label)."""
    B, S, H = inputs_embeds.shape
    C = w2.shape[1]
    if not (0 <= int(target_label) < C):
        raise ValueError(f"target_label {target_label} out of range for C={C}")

    # ---- weight prep (tiny one-off XLA ops; weights are DMA'd once) ---------
    C_pad = _round_up(max(C, 1), 128)
    w1_b = w1.astype(jnp.bfloat16)                                   # (H, H)
    b1_f = b1.reshape(1, H).astype(jnp.float32)                      # (1, H)
    w2_p = jnp.zeros((H, C_pad), jnp.bfloat16).at[:, :C].set(
        w2.astype(jnp.bfloat16))                                     # (H, C_pad)
    b2_p = jnp.full((1, C_pad), _NEG_BIG, jnp.float32).at[:, :C].set(
        b2.reshape(1, C).astype(jnp.float32))                        # (1, C_pad)

    # ---- activation feed: fuse the [CLS] slice into the kernel's DMA --------
    # Row-major (B, S, H) viewed as (B, S*H): a (TB, H) block at column-block 0
    # is exactly the [CLS] token of each row, so the input DMA does the slice
    # for free (no wrapper slice/cast/pad kernels). Needs H to be 128-aligned
    # (true for roberta 768/1024) and B sublane-aligned; otherwise fall back to
    # a wrapper slice, where a full-H block is legal for any H.
    B8 = _round_up(B, 8)
    fuse_cls_dma = (H % 128 == 0) and (B % 8 == 0)
    if fuse_cls_dma:
        x2d = inputs_embeds.reshape(B, S * H)        # free view, no copy
    else:
        x2d = inputs_embeds[:, 0, :]                 # (B, H) f32
        if B8 != B:
            x2d = jnp.pad(x2d, ((0, B8 - B), (0, 0)))

    # ---- batch tiling --------------------------------------------------------
    # Pick TB to (a) target block_b, (b) minimize last-tile waste, (c) keep at
    # least 2 grid steps when the batch allows (v7x: both TensorCores busy).
    num_tiles = max(1, _cdiv(B8, block_b))
    if B8 >= 16:
        num_tiles = max(num_tiles, 2)
    TB = _round_up(_cdiv(B8, num_tiles), 8)          # <= B8, sublane aligned
    grid_b = _cdiv(B8, TB)

    # ---- VMEM budget: cls/out tiles double-buffered, weights single ----------
    vmem_need = (2 * TB * H * 4                      # cls tiles (f32)
                 + 2 * TB * C_pad * 4                # out tiles (f32)
                 + H * H * 2 + H * 4                 # w1 bf16 + b1 f32
                 + H * C_pad * 2 + C_pad * 4)        # w2 bf16 + b2 f32
    vmem_limit = int(min(max(2 * vmem_need, 16 << 20), 48 << 20))

    resident = pl.Buffered(1)   # block index never changes -> no double buffer

    probs = pl.pallas_call(
        _clf_kernel,
        out_shape=jax.ShapeDtypeStruct((B8, C_pad), jnp.float32),
        grid_spec=pltpu.PrefetchScalarGridSpec(
            num_scalar_prefetch=0,
            grid=(grid_b,),
            in_specs=[
                pl.BlockSpec((TB, H), lambda i: (i, 0)),            # CLS tile
                pl.BlockSpec((H, H), lambda i: (0, 0),
                             pipeline_mode=resident),               # w1
                pl.BlockSpec((1, H), lambda i: (0, 0),
                             pipeline_mode=resident),               # b1
                pl.BlockSpec((H, C_pad), lambda i: (0, 0),
                             pipeline_mode=resident),               # w2
                pl.BlockSpec((1, C_pad), lambda i: (0, 0),
                             pipeline_mode=resident),               # b2
            ],
            out_specs=pl.BlockSpec((TB, C_pad), lambda i: (i, 0)),
        ),
        compiler_params=pltpu.CompilerParams(
            dimension_semantics=("parallel",),       # shards across 2 TCs (v7x)
            vmem_limit_bytes=vmem_limit),
    )(x2d, w1_b, b1_f, w2_p, b2_p)

    # Wrapper-side column select == softmax(logits)[:, target_label].unsqueeze(1)
    return probs[:B, target_label][:, None]


def clf_wrapper_forward_ref(inputs_embeds, w1, b1, w2, b2, target_label=1):
    """Pure-JAX reference using the same bf16-MXU / f32-accumulate recipe."""
    cls = inputs_embeds[:, 0, :].astype(jnp.bfloat16)
    h = jnp.dot(cls, w1.astype(jnp.bfloat16),
                preferred_element_type=jnp.float32)
    h = jnp.tanh(h + b1.reshape(1, -1).astype(jnp.float32))
    logits = jnp.dot(h.astype(jnp.bfloat16), w2.astype(jnp.bfloat16),
                     preferred_element_type=jnp.float32)
    logits = logits + b2.reshape(1, -1).astype(jnp.float32)
    probs = jax.nn.softmax(logits, axis=1)
    return probs[:, target_label][:, None]


if __name__ == "__main__":
    def _run_case(B, S, H, C, target_label):
        key = jax.random.PRNGKey(0)
        k_x, k_w1, k_b1, k_w2, k_b2 = jax.random.split(key, 5)
        inputs_embeds = jax.random.normal(k_x, (B, S, H), dtype=jnp.float32)
        w1 = jax.random.normal(k_w1, (H, H), dtype=jnp.float32) * 0.05
        b1 = jax.random.normal(k_b1, (1, H), dtype=jnp.float32) * 0.01
        w2 = jax.random.normal(k_w2, (H, C), dtype=jnp.float32) * 0.05
        b2 = jax.random.normal(k_b2, (1, C), dtype=jnp.float32) * 0.01

        out = clf_wrapper_forward(inputs_embeds, w1, b1, w2, b2,
                                  target_label=target_label)
        out = jax.block_until_ready(out)
        ref = clf_wrapper_forward_ref(inputs_embeds, w1, b1, w2, b2,
                                      target_label=target_label)
        assert out.shape == (B, 1), out.shape
        # bf16 MXU inputs -> ~1e-3-level divergence vs a pure-f32 baseline.
        assert jnp.allclose(out, ref, atol=2e-3, rtol=2e-3), (out, ref)

    # Lane-aligned H (fused [CLS]-slice DMA path), single batch tile.
    _run_case(B=2, S=8, H=128, C=2, target_label=1)
    # Odd-H fallback path, 2-step grid with a partial last batch tile.
    _run_case(B=20, S=8, H=32, C=4, target_label=2)

    # TODO(synk): the input_ids -> embedding-layer lookup path (get_embeddings /
    # calc_logits with input_ids) is a plain table gather outside this kernel;
    # only the inputs_embeds forward is implemented here.

    print("KERNEL_OK")
</pallas_src>

<mosaic_0001>
module attributes {stable_mosaic.version = 11 : i64} {
  func.func @_clf_kernel(%arg0: i32, %arg1: memref<8x128xf32, #tpu.memory_space<vmem>>, %arg2: memref<128x128xbf16, #tpu.memory_space<vmem>>, %arg3: memref<1x128xf32, #tpu.memory_space<vmem>>, %arg4: memref<128x128xbf16, #tpu.memory_space<vmem>>, %arg5: memref<1x128xf32, #tpu.memory_space<vmem>>, %arg6: memref<8x128xf32, #tpu.memory_space<vmem>>) attributes {dimension_semantics = [#tpu.dimension_semantics<parallel>], iteration_bounds = array<i64: 1>, scalar_prefetch = 0 : i64, scratch_operands = 0 : i64, tpu.core_type = #tpu.core_type<tc>, window_params = [{transform_indices = @transform_0, window_bounds = array<i64: 8, 128>}, {pipeline_mode = #tpu.pipeline_mode<synchronous>, transform_indices = @transform_1, window_bounds = array<i64: 128, 128>}, {pipeline_mode = #tpu.pipeline_mode<synchronous>, transform_indices = @transform_2, window_bounds = array<i64: 1, 128>}, {pipeline_mode = #tpu.pipeline_mode<synchronous>, transform_indices = @transform_3, window_bounds = array<i64: 128, 128>}, {pipeline_mode = #tpu.pipeline_mode<synchronous>, transform_indices = @transform_4, window_bounds = array<i64: 1, 128>}, {transform_indices = @transform_5, window_bounds = array<i64: 8, 128>}]} {
    %c0 = arith.constant 0 : index
    %c0_0 = arith.constant 0 : index
    %0 = vector.load %arg1[%c0, %c0_0] : memref<8x128xf32, #tpu.memory_space<vmem>>, vector<8x128xf32>
    %1 = arith.truncf %0 : vector<8x128xf32> to vector<8x128xbf16>
    %c0_1 = arith.constant 0 : index
    %c0_2 = arith.constant 0 : index
    %2 = vector.load %arg2[%c0_1, %c0_2] : memref<128x128xbf16, #tpu.memory_space<vmem>>, vector<128x128xbf16>
    %cst = arith.constant dense<0.000000e+00> : vector<8x128xf32>
    %3 = tpu.matmul %1, %2, %cst {dimension_numbers = #tpu.dot_dimension_numbers<[1], [0], [0], [1], [0, 0, 1, 1], [], []>} : vector<8x128xbf16>, vector<128x128xbf16>, vector<8x128xf32> -> vector<8x128xf32>
    %c0_3 = arith.constant 0 : index
    %c0_4 = arith.constant 0 : index
    %4 = vector.load %arg3[%c0_3, %c0_4] : memref<1x128xf32, #tpu.memory_space<vmem>>, vector<1x128xf32>
    %5 = vector.broadcast %4 : vector<1x128xf32> to vector<8x128xf32>
    %6 = arith.addf %3, %5 : vector<8x128xf32>
    %7 = math.tanh %6 : vector<8x128xf32>
    %8 = arith.truncf %7 : vector<8x128xf32> to vector<8x128xbf16>
    %c0_5 = arith.constant 0 : index
    %c0_6 = arith.constant 0 : index
    %9 = vector.load %arg4[%c0_5, %c0_6] : memref<128x128xbf16, #tpu.memory_space<vmem>>, vector<128x128xbf16>
    %cst_7 = arith.constant dense<0.000000e+00> : vector<8x128xf32>
    %10 = tpu.matmul %8, %9, %cst_7 {dimension_numbers = #tpu.dot_dimension_numbers<[1], [0], [0], [1], [0, 0, 1, 1], [], []>} : vector<8x128xbf16>, vector<128x128xbf16>, vector<8x128xf32> -> vector<8x128xf32>
    %c0_8 = arith.constant 0 : index
    %c0_9 = arith.constant 0 : index
    %11 = vector.load %arg5[%c0_8, %c0_9] : memref<1x128xf32, #tpu.memory_space<vmem>>, vector<1x128xf32>
    %12 = vector.broadcast %11 : vector<1x128xf32> to vector<8x128xf32>
    %13 = arith.addf %10, %12 : vector<8x128xf32>
    %cst_10 = arith.constant dense<0xFF800000> : vector<8xf32>
    %14 = vector.multi_reduction <maximumf>, %13, %cst_10 [1] : vector<8x128xf32> to vector<8xf32>
    %15 = vector.shape_cast %14 : vector<8xf32> to vector<8x1xf32>
    %16 = vector.broadcast %15 : vector<8x1xf32> to vector<8x128xf32>
    %17 = arith.subf %13, %16 : vector<8x128xf32>
    %18 = math.exp %17 : vector<8x128xf32>
    %cst_11 = arith.constant dense<0.000000e+00> : vector<8xf32>
    %19 = vector.multi_reduction <add>, %18, %cst_11 [1] : vector<8x128xf32> to vector<8xf32>
    %20 = vector.shape_cast %19 : vector<8xf32> to vector<8x1xf32>
    %21 = vector.broadcast %20 : vector<8x1xf32> to vector<8x128xf32>
    %22 = arith.divf %18, %21 : vector<8x128xf32>
    %c0_12 = arith.constant 0 : index
    %c0_13 = arith.constant 0 : index
    %23 = vector.load %arg6[%c0_12, %c0_13] : memref<8x128xf32, #tpu.memory_space<vmem>>, vector<8x128xf32>
    tpu.vector_store %arg6[%c0_12, %c0_13], %22 {strides = array<i32>} : memref<8x128xf32, #tpu.memory_space<vmem>>, vector<8x128xf32>,
    return
  }
  func.func @transform_0(%arg0: i32) -> (i32, i32) {
    %c0_i32 = arith.constant 0 : i32
    %c0_i32_0 = arith.constant 0 : i32
    return %arg0, %c0_i32 : i32, i32
  }
  func.func @transform_1(%arg0: i32) -> (i32, i32) {
    %c0_i32 = arith.constant 0 : i32
    %c0_i32_0 = arith.constant 0 : i32
    %c0_i32_1 = arith.constant 0 : i32
    return %c0_i32, %c0_i32_0 : i32, i32
  }
  func.func @transform_2(%arg0: i32) -> (i32, i32) {
    %c0_i32 = arith.constant 0 : i32
    %c0_i32_0 = arith.constant 0 : i32
    %c0_i32_1 = arith.constant 0 : i32
    return %c0_i32, %c0_i32_0 : i32, i32
  }
  func.func @transform_3(%arg0: i32) -> (i32, i32) {
    %c0_i32 = arith.constant 0 : i32
    %c0_i32_0 = arith.constant 0 : i32
    %c0_i32_1 = arith.constant 0 : i32
    return %c0_i32, %c0_i32_0 : i32, i32
  }
  func.func @transform_4(%arg0: i32) -> (i32, i32) {
    %c0_i32 = arith.constant 0 : i32
    %c0_i32_0 = arith.constant 0 : i32
    %c0_i32_1 = arith.constant 0 : i32
    return %c0_i32, %c0_i32_0 : i32, i32
  }
  func.func @transform_5(%arg0: i32) -> (i32, i32) {
    %c0_i32 = arith.constant 0 : i32
    %c0_i32_0 = arith.constant 0 : i32
    return %arg0, %c0_i32 : i32, i32
  }
}

</mosaic_0001>

<llo_original>
// kernel: tpu_custom_call.1
$region0: #{tpu_custom_call.1}
  #allocation0 [shape = 'u32[]', space=smem, size = 0x4, offset = 0x4, fixed_abs, tag = 'smem constant byte address 0x4 - core index']
  #allocation1 [shape = 'u32[144,128]{1,0:T(1,128)}', space=vmem, size = 0x12000, scoped, tag = 'internal scratch']
  %s0 = inlined_call_operand.hbm [shape: f32[8,128], index: 0, kind: input, shape index: {}]
  %s1 = inlined_call_operand.hbm [shape: bf16[128,128], index: 1, kind: input, shape index: {}]
  %s2 = inlined_call_operand.vmem [shape: f32[1,128], index: 2, kind: input, shape index: {}]
  %s3 = inlined_call_operand.hbm [shape: bf16[128,128], index: 3, kind: input, shape index: {}]
  %s4 = inlined_call_operand.vmem [shape: f32[1,128], index: 4, kind: input, shape index: {}]
  %s5 = inlined_call_operand.hbm [shape: f32[8,128], index: 5, kind: output, shape index: {}]
  %s6 = sld [smem:[#allocation0]]
  $region42: #{tpu_custom_call.1} parent=0
    _
  %s8 = ssub.s32 1, %s6
  %s9 = scalar_select 0, %s8, %s6
  $region1: #{tpu_custom_call.1} parent=0
    #allocation2 [shape = 'u8[4096]{0}', space=vmem, size = 0x1000, scoped, tag = 'input window, operand 0, single buffered']
    #allocation3 [shape = 's32[1]{0}', space=sflag, size = 0x4, scoped, tag = 'scoped memory for tpu_custom_call.1']
    #allocation4 [shape = 's32[1]{0}', space=sflag, size = 0x4, scoped, tag = 'scoped memory for tpu_custom_call.1']
    #allocation5 [shape = 'u8[32768]{0}', space=vmem, size = 0x8000, scoped, tag = 'input window, operand 1, single buffered']
    #allocation6 [shape = 's32[1]{0}', space=sflag, size = 0x4, scoped, tag = 'scoped memory for tpu_custom_call.1']
    #allocation7 [shape = 'u8[32768]{0}', space=vmem, size = 0x8000, scoped, tag = 'input window, operand 3, single buffered']
    #allocation8 [shape = 'u8[4096]{0}', space=vmem, size = 0x1000, scoped, tag = 'output window, operand 0, single buffered']
    %10 = vsyncpa [#allocation3], 0
    %11 = vsyncpa [#allocation6], 0
    %12 = vsyncpa [#allocation4], 0
    // Predicated region
    $region2: #{tpu_custom_call.1} parent=1 // pred_check
      _
    $region3: #{tpu_custom_call.1} parent=1 // pred_check_branch
      %14 = sbr.rel (0) target = $region5
    $region4: #{tpu_custom_call.1} parent=1 // pred_region
      %s16 = ssub.s32 128, 128
      %17 = vsyncadd [#allocation3], %s16
      %s19 = sshll.u32 [#allocation2], 4
      %s20 = int_to_ptr.vmem [resolvable:$true] %s19
      %22 = dma.hbm_to_vmem [thread:$0]  %s0, 128, %s20, [#allocation3]
    $region5: #{tpu_custom_call.1} parent=1 // pred_fallthru
      _
    // Predicated region
    $region6: #{tpu_custom_call.1} parent=1 // pred_check
      _
    $region7: #{tpu_custom_call.1} parent=1 // pred_check_branch
      %24 = sbr.rel (0) target = $region9
    $region8: #{tpu_custom_call.1} parent=1 // pred_region
      %s26 = ssub.s32 1024, 1024
      %27 = vsyncadd [#allocation6], %s26
      %s28 = sshll.u32 [#allocation5], 4
      %s29 = int_to_ptr.vmem [resolvable:$true] %s28
      %34 = dma.hbm_to_vmem [thread:$0]  %s1, 1024, %s29, [#allocation6], 64, 64, 4
    $region9: #{tpu_custom_call.1} parent=1 // pred_fallthru
      _
    // Predicated region
    $region10: #{tpu_custom_call.1} parent=1 // pred_check
      _
    $region11: #{tpu_custom_call.1} parent=1 // pred_check_branch
      %36 = sbr.rel (0) target = $region13
    $region12: #{tpu_custom_call.1} parent=1 // pred_region
      _
    $region13: #{tpu_custom_call.1} parent=1 // pred_fallthru
      _
    // Predicated region
    $region14: #{tpu_custom_call.1} parent=1 // pred_check
      _
    $region15: #{tpu_custom_call.1} parent=1 // pred_check_branch
      %38 = sbr.rel (0) target = $region17
    $region16: #{tpu_custom_call.1} parent=1 // pred_region
      %s40 = ssub.s32 1024, 1024
      %41 = vsyncadd [#allocation6], %s40
      %s42 = sshll.u32 [#allocation7], 4
      %s43 = int_to_ptr.vmem [resolvable:$true] %s42
      %48 = dma.hbm_to_vmem [thread:$0]  %s3, 1024, %s43, [#allocation6], 64, 64, 4
    $region17: #{tpu_custom_call.1} parent=1 // pred_fallthru
      _
    // Predicated region
    $region18: #{tpu_custom_call.1} parent=1 // pred_check
      _
    $region19: #{tpu_custom_call.1} parent=1 // pred_check_branch
      %50 = sbr.rel (0) target = $region21
    $region20: #{tpu_custom_call.1} parent=1 // pred_region
      _
    $region21: #{tpu_custom_call.1} parent=1 // pred_fallthru
      _
    // Predicated region
    $region22: #{tpu_custom_call.1} parent=1 // pred_check
      _
    $region23: #{tpu_custom_call.1} parent=1 // pred_check_branch
      %52 = sbr.rel (0) target = $region25
    $region24: #{tpu_custom_call.1} parent=1 // pred_region
      %53 = dma.done [#allocation3], 128
    $region25: #{tpu_custom_call.1} parent=1 // pred_fallthru
      _
    // Predicated region
    $region26: #{tpu_custom_call.1} parent=1 // pred_check
      _
    $region27: #{tpu_custom_call.1} parent=1 // pred_check_branch
      %55 = sbr.rel (0) target = $region29
    $region28: #{tpu_custom_call.1} parent=1 // pred_region
      %56 = dma.done [#allocation6], 1024
    $region29: #{tpu_custom_call.1} parent=1 // pred_fallthru
      _
    // Predicated region
    $region30: #{tpu_custom_call.1} parent=1 // pred_check
      _
    $region31: #{tpu_custom_call.1} parent=1 // pred_check_branch
      %58 = sbr.rel (0) target = $region33
    $region32: #{tpu_custom_call.1} parent=1 // pred_region
      %59 = dma.done [#allocation6], 1024
    $region33: #{tpu_custom_call.1} parent=1 // pred_fallthru
      _
    %v61 = vld [vmem:[#allocation2] sm:$0xff]
    %v62 = vpack.c.bf16 %v61, %v61
    %v63 = vld [vmem:[#allocation5] sm:$0xf]
    %v64 = vld [vmem:[#allocation5 + $0x4] sm:$0xf]
    %v65 = vld [vmem:[#allocation5 + $0x8] sm:$0xf]
    %v66 = vld [vmem:[#allocation5 + $0xc] sm:$0xf]
    %v67 = vld [vmem:[#allocation5 + $0x10] sm:$0xf]
    %v68 = vld [vmem:[#allocation5 + $0x14] sm:$0xf]
    %v69 = vld [vmem:[#allocation5 + $0x18] sm:$0xf]
    %v70 = vld [vmem:[#allocation5 + $0x1c] sm:$0xf]
    %v71 = vld [vmem:[#allocation5 + $0x20] sm:$0xf]
    %v72 = vld [vmem:[#allocation5 + $0x24] sm:$0xf]
    %v73 = vld [vmem:[#allocation5 + $0x28] sm:$0xf]
    %v74 = vld [vmem:[#allocation5 + $0x2c] sm:$0xf]
    %v75 = vld [vmem:[#allocation5 + $0x30] sm:$0xf]
    %v76 = vld [vmem:[#allocation5 + $0x34] sm:$0xf]
    %v77 = vld [vmem:[#allocation5 + $0x38] sm:$0xf]
    %v78 = vld [vmem:[#allocation5 + $0x3c] sm:$0xf]
    %v79 = vld [vmem:[%s2] sm:$0x1]
    %v81 = vlaneseq
    %v82 = vshrl.u32 %v81, 7
    %v83 = vsub.s32 0, %v82
    %v84 = vrot.slane %v79, %v83
    %v102 = vunpack.c.l.b16 %v63
    %v103 = vunpack.c.l.b16 %v64
    %v104 = vunpack.c.l.b16 %v65
    %v105 = vunpack.c.l.b16 %v66
    %v106 = vunpack.c.l.b16 %v67
    %v107 = vunpack.c.l.b16 %v68
    %v108 = vunpack.c.l.b16 %v69
    %v109 = vunpack.c.l.b16 %v70
    %v110 = vunpack.c.l.b16 %v71
    %v111 = vunpack.c.l.b16 %v72
    %v112 = vunpack.c.l.b16 %v73
    %v113 = vunpack.c.l.b16 %v74
    %v114 = vunpack.c.l.b16 %v75
    %v115 = vunpack.c.l.b16 %v76
    %v116 = vunpack.c.l.b16 %v77
    %v117 = vunpack.c.l.b16 %v78
    %v118 = vpack.c.b16 %v103, %v102
    %v119 = vpack.c.b16 %v105, %v104
    %v120 = vpack.c.b16 %v107, %v106
    %v121 = vpack.c.b16 %v109, %v108
    %v122 = vpack.c.b16 %v111, %v110
    %v123 = vpack.c.b16 %v113, %v112
    %v124 = vpack.c.b16 %v115, %v114
    %v125 = vpack.c.b16 %v117, %v116
    %134 = vmatprep.subr.bf16.mxu0 0
    %135 = vmatpush1.bf16.msra.mxu0 %v118
    %136 = vmatprep.subr.bf16.mxu0 0
    %137 = vmatpush1.bf16.msra.mxu0 %v119
    %138 = vmatprep.subr.bf16.mxu0 0
    %139 = vmatpush1.bf16.msra.mxu0 %v120
    %140 = vmatprep.subr.bf16.mxu0 0
    %141 = vmatpush1.bf16.msra.mxu0 %v121
    %142 = vmatprep.subr.bf16.mxu0 0
    %143 = vmatpush1.bf16.msra.mxu0 %v122
    %144 = vmatprep.subr.bf16.mxu0 0
    %145 = vmatpush1.bf16.msra.mxu0 %v123
    %146 = vmatprep.subr.bf16.mxu0 0
    %147 = vmatpush1.bf16.msra.mxu0 %v124
    %148 = vmatprep.subr.bf16.mxu0 0
    %149 = vmatpush1.bf16.msra.mxu0 %v125
    %150 = vmatprep.subr.bf16.mxu0 0
    %151 = vmatpush1.bf16.msra.mxu0 0
    %152 = vmatprep.subr.bf16.mxu0 0
    %153 = vmatpush1.bf16.msra.mxu0 0
    %154 = vmatprep.subr.bf16.mxu0 0
    %155 = vmatpush1.bf16.msra.mxu0 0
    %156 = vmatprep.subr.bf16.mxu0 0
    %157 = vmatpush1.bf16.msra.mxu0 0
    %158 = vmatprep.subr.bf16.mxu0 0
    %159 = vmatpush1.bf16.msra.mxu0 0
    %160 = vmatprep.subr.bf16.mxu0 0
    %161 = vmatpush1.bf16.msra.mxu0 0
    %162 = vmatprep.subr.bf16.mxu0 0
    %163 = vmatpush1.bf16.msra.mxu0 0
    %164 = vmatprep.subr.bf16.mxu0 0
    %165 = vmatpush1.bf16.msra.mxu0 0
    %166 = vmatprep.mubr.bf16.mxu0 0
    %167 = vmatmul.mubr.bf16.gmra.mrb[0].mxu0 %v62
    %v168 = vpop.f32.mrb[0].mxu0
    %v169 = vadd.f32 %v84, %v168
    %v170 = vpop.f32.mrb[0].mxu0
    %v171 = vpop.f32.mrb[0].mxu0
    %v172 = vpop.f32.mrb[0].mxu0
    %173 = vdwg.mxu0
    %v174 = vtanh.pop %v169
    %v175 = vpack.c.bf16 %v174, %v174
    %v176 = vld [vmem:[#allocation7] sm:$0xf]
    %v177 = vld [vmem:[#allocation7 + $0x4] sm:$0xf]
    %v178 = vld [vmem:[#allocation7 + $0x8] sm:$0xf]
    %v179 = vld [vmem:[#allocation7 + $0xc] sm:$0xf]
    %v180 = vld [vmem:[#allocation7 + $0x10] sm:$0xf]
    %v181 = vld [vmem:[#allocation7 + $0x14] sm:$0xf]
    %v182 = vld [vmem:[#allocation7 + $0x18] sm:$0xf]
    %v183 = vld [vmem:[#allocation7 + $0x1c] sm:$0xf]
    %v184 = vld [vmem:[#allocation7 + $0x20] sm:$0xf]
    %v185 = vld [vmem:[#allocation7 + $0x24] sm:$0xf]
    %v186 = vld [vmem:[#allocation7 + $0x28] sm:$0xf]
    %v187 = vld [vmem:[#allocation7 + $0x2c] sm:$0xf]
    %v188 = vld [vmem:[#allocation7 + $0x30] sm:$0xf]
    %v189 = vld [vmem:[#allocation7 + $0x34] sm:$0xf]
    %v190 = vld [vmem:[#allocation7 + $0x38] sm:$0xf]
    %v191 = vld [vmem:[#allocation7 + $0x3c] sm:$0xf]
    %v192 = vld [vmem:[%s4] sm:$0x1]
    %v194 = vlaneseq
    %v195 = vshrl.u32 %v194, 7
    %v196 = vsub.s32 0, %v195
    %v197 = vrot.slane %v192, %v196
    %v215 = vunpack.c.l.b16 %v176
    %v216 = vunpack.c.l.b16 %v177
    %v217 = vunpack.c.l.b16 %v178
    %v218 = vunpack.c.l.b16 %v179
    %v219 = vunpack.c.l.b16 %v180
    %v220 = vunpack.c.l.b16 %v181
    %v221 = vunpack.c.l.b16 %v182
    %v222 = vunpack.c.l.b16 %v183
    %v223 = vunpack.c.l.b16 %v184
    %v224 = vunpack.c.l.b16 %v185
    %v225 = vunpack.c.l.b16 %v186
    %v226 = vunpack.c.l.b16 %v187
    %v227 = vunpack.c.l.b16 %v188
    %v228 = vunpack.c.l.b16 %v189
    %v229 = vunpack.c.l.b16 %v190
    %v230 = vunpack.c.l.b16 %v191
    %v231 = vpack.c.b16 %v216, %v215
    %v232 = vpack.c.b16 %v218, %v217
    %v233 = vpack.c.b16 %v220, %v219
    %v234 = vpack.c.b16 %v222, %v221
    %v235 = vpack.c.b16 %v224, %v223
    %v236 = vpack.c.b16 %v226, %v225
    %v237 = vpack.c.b16 %v228, %v227
    %v238 = vpack.c.b16 %v230, %v229
    %247 = vmatprep.subr.bf16.mxu0 0
    %248 = vmatpush1.bf16.msra.mxu0 %v231
    %249 = vmatprep.subr.bf16.mxu0 0
    %250 = vmatpush1.bf16.msra.mxu0 %v232
    %251 = vmatprep.subr.bf16.mxu0 0
    %252 = vmatpush1.bf16.msra.mxu0 %v233
    %253 = vmatprep.subr.bf16.mxu0 0
    %254 = vmatpush1.bf16.msra.mxu0 %v234
    %255 = vmatprep.subr.bf16.mxu0 0
    %256 = vmatpush1.bf16.msra.mxu0 %v235
    %257 = vmatprep.subr.bf16.mxu0 0
    %258 = vmatpush1.bf16.msra.mxu0 %v236
    %259 = vmatprep.subr.bf16.mxu0 0
    %260 = vmatpush1.bf16.msra.mxu0 %v237
    %261 = vmatprep.subr.bf16.mxu0 0
    %262 = vmatpush1.bf16.msra.mxu0 %v238
    %263 = vmatprep.subr.bf16.mxu0 0
    %264 = vmatpush1.bf16.msra.mxu0 0
    %265 = vmatprep.subr.bf16.mxu0 0
    %266 = vmatpush1.bf16.msra.mxu0 0
    %267 = vmatprep.subr.bf16.mxu0 0
    %268 = vmatpush1.bf16.msra.mxu0 0
    %269 = vmatprep.subr.bf16.mxu0 0
    %270 = vmatpush1.bf16.msra.mxu0 0
    %271 = vmatprep.subr.bf16.mxu0 0
    %272 = vmatpush1.bf16.msra.mxu0 0
    %273 = vmatprep.subr.bf16.mxu0 0
    %274 = vmatpush1.bf16.msra.mxu0 0
    %275 = vmatprep.subr.bf16.mxu0 0
    %276 = vmatpush1.bf16.msra.mxu0 0
    %277 = vmatprep.subr.bf16.mxu0 0
    %278 = vmatpush1.bf16.msra.mxu0 0
    %279 = vmatprep.mubr.bf16.mxu0 0
    %280 = vmatmul.mubr.bf16.gmra.mrb[0].mxu0 %v175
    %v281 = vpop.f32.mrb[0].mxu0
    %v282 = vadd.f32 %v197, %v281
    %v283 = vpop.f32.mrb[0].mxu0
    %v284 = vpop.f32.mrb[0].mxu0
    %v285 = vpop.f32.mrb[0].mxu0
    %286 = vdwg.mxu0
    %287 = vmax.xlane.f32.xlu0 %v282
    %v288 = vpop.xlane.xlu0 %287
    %v289 = vsub.f32 %v282, %v288
    %v290 = vmul.f32 %v289, 1.442695
    %v291 = vpow.pop %v290
    %292 = vadd.xlane.f32.xlu0 %v291
    %v293 = vpop.xlane.xlu0 %292
    %v294 = vrcp.pop %v293
    %v295 = vmul.f32 %v291, %v294
    %296 = vst [vmem:[#allocation8] sm:$0xff] %v295
    // Predicated region
    $region34: #{tpu_custom_call.1} parent=1 // pred_check
      _
    $region35: #{tpu_custom_call.1} parent=1 // pred_check_branch
      %298 = sbr.rel (0) target = $region37
    $region36: #{tpu_custom_call.1} parent=1 // pred_region
      %s300 = ssub.s32 128, 128
      %301 = vsyncadd [#allocation4], %s300
      %s303 = sshll.u32 [#allocation8], 4
      %s304 = int_to_ptr.vmem [resolvable:$true] %s303
      %306 = dma.vmem_to_hbm [thread:$0]  %s304, 128, %s5, [#allocation4]
    $region37: #{tpu_custom_call.1} parent=1 // pred_fallthru
      _
    // Predicated region
    $region38: #{tpu_custom_call.1} parent=1 // pred_check
      _
    $region39: #{tpu_custom_call.1} parent=1 // pred_check_branch
      %308 = sbr.rel (0) target = $region41
    $region40: #{tpu_custom_call.1} parent=1 // pred_region
      %309 = dma.done [#allocation4], 128
    $region41: #{tpu_custom_call.1} parent=1 // pred_fallthru
      _
    %310 = vsyncpa [#allocation3], 1
    %311 = vsyncpa [#allocation6], 1
    %312 = vsyncpa [#allocation4], 1

</llo_original>
